<compile_context>
chip_gen: v7x
topology: tpu7x:2x2x1
jax: 0.10.0
libtpu: 0.0.40
codegen_flags: <defaults>
</compile_context>

<pallas_src>
import jax
import jax.numpy as jnp
from jax.experimental import pallas as pl
from jax.experimental.pallas import tpu as pltpu


def _round_up(x, m):
    return ((x + m - 1) // m) * m


def _round_down(x, m):
    return (x // m) * m


def bcslp_kernel(x_ref, w_ref, b_ref, o_ref):
    # x_ref: (tb, D) VMEM tile, w_ref: (1, D) VMEM, b_ref: (1,) f32 SMEM,
    # o_ref: (tb, 2) VMEM tile.
    #
    # N=1 matvec on the VPU (broadcast multiply) + XLU lane reduction,
    # accumulated in f32; the degenerate N=1 MXU matmul is avoided on purpose.
    prod = x_ref[...].astype(jnp.float32) * w_ref[...].astype(jnp.float32)
    y1 = jnp.sum(prod, axis=-1, keepdims=True) + b_ref[0]      # (tb, 1) f32
    y1 = y1.astype(o_ref.dtype)
    # Single fused store of both class columns (halves the masked-vst count).
    o_ref[...] = jnp.concatenate([-y1, y1], axis=1)


def bcslp_forward(x, weight, bias, *, tile_vmem_budget_bytes=16 * 1024 * 1024):
    """x: (B, D); weight: (1, D) (PyTorch nn.Linear layout); bias: (1,).

    Returns (B, 2) = [-y1, y1] matching BCSLP.forward.
    """
    B, D = x.shape
    w = weight.reshape(1, D)                    # lane-dense: D on the lane axis
    b = bias.reshape(1).astype(jnp.float32)     # scalar bias, lives in SMEM

    itemsize = jnp.dtype(x.dtype).itemsize
    sublane = max(8, 32 // itemsize)            # 8 for f32, 16 bf16, 32 int8
    lane = 128

    # Bytes-based batch tiling: size tb so the double-buffered, VMEM-padded
    # footprint of the x tile + the (tb, 2) output tile (which lane-pads to
    # 128) stays within a fixed budget sized with v7x's 64 MiB VMEM in mind.
    x_row_bytes = _round_up(D, lane) * itemsize       # x tile row, lane-padded
    o_row_bytes = lane * itemsize                     # (tb, 2) pads to 128 lanes
    per_row_bytes = 2 * (x_row_bytes + o_row_bytes)   # x2 for double buffering
    tb_cap = max(sublane,
                 _round_down(tile_vmem_budget_bytes // per_row_bytes, sublane))

    if B <= tb_cap:
        if B >= 2 * sublane:
            # Whole batch fits one tile; still split into two grid steps so
            # both v7x TensorCores get work under "parallel" semantics.
            tb = _round_up(pl.cdiv(B, 2), sublane)
        else:
            tb = B                              # full extent (single tiny tile)
    else:
        tb = tb_cap                             # sublane-aligned; last block may be partial

    grid = (pl.cdiv(B, tb),)

    return pl.pallas_call(
        bcslp_kernel,
        out_shape=jax.ShapeDtypeStruct((B, 2), x.dtype),
        grid=grid,
        in_specs=[
            pl.BlockSpec((tb, D), lambda i: (i, 0)),              # x tile
            pl.BlockSpec((1, D), lambda i: (0, 0)),               # weight
            pl.BlockSpec(memory_space=pltpu.MemorySpace.SMEM),    # bias scalar
        ],
        out_specs=pl.BlockSpec((tb, 2), lambda i: (i, 0)),
        compiler_params=pltpu.CompilerParams(
            dimension_semantics=("parallel",),
            vmem_limit_bytes=32 * 1024 * 1024,
        ),
    )(x, w, b)


def _reference(x, weight, bias):
    y1 = x @ weight.reshape(1, -1).T + bias.reshape(1)
    return jnp.concatenate([-y1, y1], axis=1)


if __name__ == "__main__":
    key = jax.random.PRNGKey(0)
    kx, kw, kb, kx2 = jax.random.split(key, 4)

    # Small demo shapes consistent with the module: batch=8, n_dims=32.
    B, D = 8, 32
    x = jax.random.normal(kx, (B, D), dtype=jnp.float32)
    # Deterministic "init" matching nn.Linear(n_dims, 1) parameter shapes.
    bound = 1.0 / (D ** 0.5)
    weight = jax.random.uniform(kw, (1, D), minval=-bound, maxval=bound,
                                dtype=jnp.float32)
    bias = jax.random.uniform(kb, (1,), minval=-bound, maxval=bound,
                              dtype=jnp.float32)

    out = jax.block_until_ready(bcslp_forward(x, weight, bias))
    ref = _reference(x, weight, bias)
    assert out.shape == (B, 2)
    assert jnp.allclose(out, ref, atol=1e-5, rtol=1e-5)

    # Second small case exercising a multi-step grid and a partial final block.
    B2 = 300
    x2 = jax.random.normal(kx2, (B2, D), dtype=jnp.float32)
    out2 = jax.block_until_ready(bcslp_forward(x2, weight, bias))
    ref2 = _reference(x2, weight, bias)
    assert out2.shape == (B2, 2)
    assert jnp.allclose(out2, ref2, atol=1e-5, rtol=1e-5)

    print("KERNEL_OK")
</pallas_src>

<mosaic_0001>
module attributes {stable_mosaic.version = 11 : i64} {
  func.func @bcslp_kernel(%arg0: i32, %arg1: memref<8x32xf32, #tpu.memory_space<vmem>>, %arg2: memref<1x32xf32, #tpu.memory_space<vmem>>, %arg3: memref<1xf32, #tpu.memory_space<smem>>, %arg4: memref<8x2xf32, #tpu.memory_space<vmem>>) attributes {dimension_semantics = [#tpu.dimension_semantics<parallel>], iteration_bounds = array<i64: 1>, scalar_prefetch = 0 : i64, scratch_operands = 0 : i64, tpu.core_type = #tpu.core_type<tc>, window_params = [{transform_indices = @transform_0, window_bounds = array<i64: 8, 32>}, {pipeline_mode = #tpu.pipeline_mode<synchronous>, transform_indices = @transform_1, window_bounds = array<i64: 1, 32>}, {transform_indices = @transform_2, window_bounds = array<i64: 1>}, {transform_indices = @transform_3, window_bounds = array<i64: 8, 2>}]} {
    %c0 = arith.constant 0 : index
    %c0_0 = arith.constant 0 : index
    %0 = vector.load %arg1[%c0, %c0_0] : memref<8x32xf32, #tpu.memory_space<vmem>>, vector<8x32xf32>
    %c0_1 = arith.constant 0 : index
    %c0_2 = arith.constant 0 : index
    %1 = vector.load %arg2[%c0_1, %c0_2] : memref<1x32xf32, #tpu.memory_space<vmem>>, vector<1x32xf32>
    %2 = vector.broadcast %1 : vector<1x32xf32> to vector<8x32xf32>
    %3 = arith.mulf %0, %2 : vector<8x32xf32>
    %cst = arith.constant dense<0.000000e+00> : vector<8xf32>
    %4 = vector.multi_reduction <add>, %3, %cst [1] : vector<8x32xf32> to vector<8xf32>
    %5 = vector.shape_cast %4 : vector<8xf32> to vector<8x1xf32>
    %c0_3 = arith.constant 0 : index
    %6 = memref.load %arg3[%c0_3] : memref<1xf32, #tpu.memory_space<smem>>
    %7 = vector.broadcast %6 : f32 to vector<8x1xf32>
    %8 = arith.addf %5, %7 : vector<8x1xf32>
    %cst_4 = arith.constant 0.000000e+00 : f32
    %9 = vector.broadcast %cst_4 : f32 to vector<8x1xf32>
    %10 = arith.subf %9, %8 : vector<8x1xf32>
    %11 = tpu.concatenate %10, %8 in 1 : vector<8x1xf32>, vector<8x1xf32> -> vector<8x2xf32>
    %c0_5 = arith.constant 0 : index
    %c0_6 = arith.constant 0 : index
    %12 = vector.load %arg4[%c0_5, %c0_6] : memref<8x2xf32, #tpu.memory_space<vmem>>, vector<8x2xf32>
    tpu.vector_store %arg4[%c0_5, %c0_6], %11 {strides = array<i32>} : memref<8x2xf32, #tpu.memory_space<vmem>>, vector<8x2xf32>,
    return
  }
  func.func @transform_0(%arg0: i32) -> (i32, i32) {
    %c0_i32 = arith.constant 0 : i32
    %c0_i32_0 = arith.constant 0 : i32
    return %arg0, %c0_i32 : i32, i32
  }
  func.func @transform_1(%arg0: i32) -> (i32, i32) {
    %c0_i32 = arith.constant 0 : i32
    %c0_i32_0 = arith.constant 0 : i32
    %c0_i32_1 = arith.constant 0 : i32
    return %c0_i32, %c0_i32_0 : i32, i32
  }
  func.func @transform_2(%arg0: i32) -> i32 {
    %c0_i32 = arith.constant 0 : i32
    %c0_i32_0 = arith.constant 0 : i32
    return %c0_i32 : i32
  }
  func.func @transform_3(%arg0: i32) -> (i32, i32) {
    %c0_i32 = arith.constant 0 : i32
    %c0_i32_0 = arith.constant 0 : i32
    return %arg0, %c0_i32 : i32, i32
  }
}

</mosaic_0001>

<llo_original>
// kernel: tpu_custom_call.1
$region0: #{tpu_custom_call.1}
  #allocation0 [shape = 'u32[]', space=smem, size = 0x4, offset = 0x4, fixed_abs, tag = 'smem constant byte address 0x4 - core index']
  #allocation1 [shape = 'u32[144,128]{1,0:T(1,128)}', space=vmem, size = 0x12000, scoped, tag = 'internal scratch']
  #allocation2 [shape = 'f32[1]{0:T(128)S(6)}', space=smem, size = 0x200, scoped, tag = 'scoped memory for tpu_custom_call.1']
  %s0 = inlined_call_operand.hbm [shape: f32[8,32], index: 0, kind: input, shape index: {}]
  %s1 = inlined_call_operand.vmem [shape: f32[1,32], index: 1, kind: input, shape index: {}]
  %s2 = inlined_call_operand.<no memory space> [shape: f32[1], index: 2, kind: input, shape index: {}]
  %s3 = inlined_call_operand.vmem [shape: f32[8,2], index: 3, kind: output, shape index: {}]
  %s4 = sld [smem:[#allocation0]]
  $region26: #{tpu_custom_call.1} parent=0
    _
  %s6 = ssub.s32 1, %s4
  %s7 = scalar_select 0, %s6, %s4
  %8 = sst [smem:[#allocation2]] %s2
  $region1: #{tpu_custom_call.1} parent=0
    #allocation3 [shape = 'u8[4096]{0}', space=vmem, size = 0x1000, scoped, tag = 'input window, operand 0, single buffered']
    #allocation4 [shape = 's32[1]{0}', space=sflag, size = 0x4, scoped, tag = 'scoped memory for tpu_custom_call.1']
    %9 = vsyncpa [#allocation4], 0
    // Predicated region
    $region2: #{tpu_custom_call.1} parent=1 // pred_check
      _
    $region3: #{tpu_custom_call.1} parent=1 // pred_check_branch
      %11 = sbr.rel (0) target = $region5
    $region4: #{tpu_custom_call.1} parent=1 // pred_region
      %s13 = ssub.s32 128, 128
      %14 = vsyncadd [#allocation4], %s13
      %s16 = sshll.u32 [#allocation3], 4
      %s17 = int_to_ptr.vmem [resolvable:$true] %s16
      %19 = dma.hbm_to_vmem [thread:$0]  %s0, 128, %s17, [#allocation4]
    $region5: #{tpu_custom_call.1} parent=1 // pred_fallthru
      _
    // Predicated region
    $region6: #{tpu_custom_call.1} parent=1 // pred_check
      _
    $region7: #{tpu_custom_call.1} parent=1 // pred_check_branch
      %21 = sbr.rel (0) target = $region9
    $region8: #{tpu_custom_call.1} parent=1 // pred_region
      _
    $region9: #{tpu_custom_call.1} parent=1 // pred_fallthru
      _
    // Predicated region
    $region10: #{tpu_custom_call.1} parent=1 // pred_check
      _
    $region11: #{tpu_custom_call.1} parent=1 // pred_check_branch
      %23 = sbr.rel (0) target = $region13
    $region12: #{tpu_custom_call.1} parent=1 // pred_region
      _
    $region13: #{tpu_custom_call.1} parent=1 // pred_fallthru
      _
    // Predicated region
    $region14: #{tpu_custom_call.1} parent=1 // pred_check
      _
    $region15: #{tpu_custom_call.1} parent=1 // pred_check_branch
      %25 = sbr.rel (0) target = $region17
    $region16: #{tpu_custom_call.1} parent=1 // pred_region
      %26 = dma.done [#allocation4], 128
    $region17: #{tpu_custom_call.1} parent=1 // pred_fallthru
      _
    %v27 = vld [vmem:[#allocation3] sm:$0xff]
    %v28 = vld [vmem:[%s1] sm:$0x1]
    %v30 = vlaneseq
    %v31 = vshrl.u32 %v30, 7
    %v32 = vsub.s32 0, %v31
    %v33 = vrot.slane %v28, %v32
    %v35 = vmul.f32 %v27, %v33
    %vm36 = vcmask 261120
    %v37 = vsel %vm36, %v35, 0.0
    %38 = vadd.xlane.f32.xlu0 %v37
    %v39 = vpop.xlane.xlu0 %38
    %s40 = sld [smem:[#allocation2]]
    %v41 = vstv %s40
    %v42 = vadd.f32 %v39, %v41
    %v43 = vsub.f32 0.0, %v42
    %vm44 = vcmask 7168
    %v45 = vsel %vm44, %v43, %v42
    %vm46 = vcmask 15360
    %47 = vst.msk [vmem:[%s3] sm:$0xff] %vm46, %v45
    // Predicated region
    $region18: #{tpu_custom_call.1} parent=1 // pred_check
      _
    $region19: #{tpu_custom_call.1} parent=1 // pred_check_branch
      %49 = sbr.rel (0) target = $region21
    $region20: #{tpu_custom_call.1} parent=1 // pred_region
      _
    $region21: #{tpu_custom_call.1} parent=1 // pred_fallthru
      _
    // Predicated region
    $region22: #{tpu_custom_call.1} parent=1 // pred_check
      _
    $region23: #{tpu_custom_call.1} parent=1 // pred_check_branch
      %51 = sbr.rel (0) target = $region25
    $region24: #{tpu_custom_call.1} parent=1 // pred_region
      _
    $region25: #{tpu_custom_call.1} parent=1 // pred_fallthru
      _
    %52 = vsyncpa [#allocation4], 1

</llo_original>
